<compile_context>
chip_gen: v7x
topology: tpu7x:2x2x1
jax: 0.10.0
libtpu: 0.0.40
codegen_flags: <defaults>
</compile_context>

<pallas_src>
import functools
import math

import jax
import jax.numpy as jnp
from jax.experimental import pallas as pl
from jax.experimental.pallas import tpu as pltpu


def _flash_attn_kernel(q_ref, k_ref, v_ref, mask_ref, o_ref,
                       m_scr, l_scr, acc_scr,
                       *, num_heads, head_size):
    """Grid = (batch, q_tile, kv_tile); kv_tile is the innermost (reduction) axis.

    q_ref/k_ref/v_ref: (1, H, t, hs) bf16, already projected, head-major; q is
    already scaled by 1/sqrt(hs).  mask_ref: (1, 1, tk) int32 key mask.
    """
    ki = pl.program_id(2)
    n_kv = pl.num_programs(2)

    # ---- once per (batch, q-tile): reset online-softmax state.
    @pl.when(ki == 0)
    def _():
        m_scr[...] = jnp.full_like(m_scr, -1e30)
        l_scr[...] = jnp.zeros_like(l_scr)
        acc_scr[...] = jnp.zeros_like(acc_scr)

    qh = q_ref[0]                                                       # (H, tq, hs) bf16
    kh = k_ref[0]                                                       # (H, tk, hs) bf16
    vh = v_ref[0]                                                       # (H, tk, hs) bf16

    # ---- attention scores for all heads at once (batched over H on the MXU).
    s = jnp.einsum('hqd,hkd->hqk', qh, kh,
                   preferred_element_type=jnp.float32)                  # (H, tq, tk) f32

    # Additive mask bias computed once for all heads; large finite negative so
    # fully-masked rows stay NaN-free (no exp(-inf - -inf)).
    mask_bias = (mask_ref[0].astype(jnp.float32) - 1.0) * 1e30          # (1, tk)
    s = s + mask_bias

    # ---- online-softmax update (flash-attention style).
    # TODO(synk): on v6e/v7x the exp could run in bf16 once EUP/VPU-bound; kept
    # f32 here for portability (v5e has no bf16 EUP/VPU) and accuracy.
    m_prev = m_scr[...]                                                 # (H, tq, 1)
    m_new = jnp.maximum(m_prev, jnp.max(s, axis=-1, keepdims=True))
    alpha = jnp.exp(m_prev - m_new)
    p = jnp.exp(s - m_new)                                              # (H, tq, tk)
    l_scr[...] = alpha * l_scr[...] + jnp.sum(p, axis=-1, keepdims=True)
    acc_scr[...] = alpha * acc_scr[...] + jnp.einsum(
        'hqk,hkd->hqd', p.astype(jnp.bfloat16), vh,
        preferred_element_type=jnp.float32)                             # (H, tq, hs)
    m_scr[...] = m_new

    # TODO(synk): nn.Dropout on attention weights is a no-op in eval mode; omitted.

    # ---- finalize: normalize and emit a lane-dense (tq, D) context slab
    #      (single transpose per q-tile; the output projection runs in XLA).
    @pl.when(ki == n_kv - 1)
    def _():
        ctx = acc_scr[...] * pl.reciprocal(l_scr[...], approx=True)     # (H, tq, hs) f32
        tq = ctx.shape[1]
        o_ref[0] = ctx.transpose(1, 0, 2).reshape(
            tq, num_heads * head_size).astype(o_ref.dtype)


def _flash_attention(qh, kh, vh, mask, *, q_tile, kv_tile):
    """qh/kh/vh: (B, H, M, hs) bf16 (q pre-scaled); mask: (B, 1, M) int32.

    Returns the concatenated per-head context, shape (B, M, H*hs) float32.
    """
    B, H, M, hs = qh.shape
    D = H * hs
    tq, tk = q_tile, kv_tile
    n_q, n_kv = M // tq, M // tk

    kernel = functools.partial(_flash_attn_kernel, num_heads=H, head_size=hs)

    # Derive a VMEM budget from actual block/scratch sizes (double-buffered
    # inputs/outputs + scratch + score-tile headroom), capped for v7x (64 MiB).
    blk_bytes = (tq * D * 2          # q block (bf16)
                 + 2 * tk * D * 2    # k + v blocks (bf16)
                 + tk * 4            # mask block
                 + tq * D * 4)       # output block (f32)
    scratch_bytes = H * tq * (hs + 2) * 4
    score_bytes = 3 * H * tq * tk * 4          # s, p, and slop
    vmem_limit = int(min(max(2 * blk_bytes + scratch_bytes + score_bytes + (8 << 20),
                             32 << 20),
                         56 << 20))

    return pl.pallas_call(
        kernel,
        out_shape=jax.ShapeDtypeStruct((B, M, D), jnp.float32),
        grid_spec=pltpu.PrefetchScalarGridSpec(
            num_scalar_prefetch=0,
            grid=(B, n_q, n_kv),
            in_specs=[
                # q block is constant across ki -> fetched once per q-tile.
                pl.BlockSpec((1, H, tq, hs), lambda b, qi, ki: (b, 0, qi, 0)),  # q
                pl.BlockSpec((1, H, tk, hs), lambda b, qi, ki: (b, 0, ki, 0)),  # k
                pl.BlockSpec((1, H, tk, hs), lambda b, qi, ki: (b, 0, ki, 0)),  # v
                pl.BlockSpec((1, 1, tk), lambda b, qi, ki: (b, 0, ki)),         # key mask
            ],
            out_specs=pl.BlockSpec((1, tq, D), lambda b, qi, ki: (b, qi, 0)),
            scratch_shapes=[
                pltpu.VMEM((H, tq, 1), jnp.float32),    # running max m
                pltpu.VMEM((H, tq, 1), jnp.float32),    # running sum l
                pltpu.VMEM((H, tq, hs), jnp.float32),   # running context
            ],
        ),
        compiler_params=pltpu.CompilerParams(
            dimension_semantics=("parallel", "parallel", "arbitrary"),
            vmem_limit_bytes=vmem_limit,
        ),
    )(qh, kh, vh, mask)


def multi_headed_attention(k, v, q, mask, params, num_heads,
                           *, q_tile=None, kv_tile=None):
    """k, v, q: [B, M, D] float32; mask: [B, 1, M] int32 (1 = attend, 0 = masked)."""
    B, M, D = q.shape
    assert D % num_heads == 0
    hs = D // num_heads
    wk, bk, wv, bv, wq, bq, wo, bo = params
    scale = 1.0 / math.sqrt(hs)

    # ---- tile selection (per-generation friendly defaults).
    def _default_tile(m):
        if m % 256 == 0:
            return 256
        return m if m <= 256 else 128

    tq = q_tile if q_tile is not None else _default_tile(M)
    tk = kv_tile if kv_tile is not None else _default_tile(M)
    # v7x has 2 TensorCores: make sure the 'parallel' axes give it >= 2 steps.
    if q_tile is None and B == 1 and tq == M and M >= 16 and M % 16 == 0:
        tq = M // 2
    assert M % tq == 0 and M % tk == 0
    assert tq == M or tq % 8 == 0          # sublane rule for the query tile
    assert tk == M or tk % 128 == 0        # lane rule for the mask tile

    # ---- Q/K/V projections as plain XLA GEMMs (bf16 on the MXU, f32 accumulate),
    #      delivered head-major (B, H, M, hs) so the kernel never relayouts.
    def project(x, w, b):
        y = jnp.einsum('bmd,de->bme', x.astype(jnp.bfloat16), w.astype(jnp.bfloat16),
                       preferred_element_type=jnp.float32) + b
        return y.reshape(B, M, num_heads, hs).transpose(0, 2, 1, 3)     # (B, H, M, hs)

    qh = (project(q, wq, bq) * scale).astype(jnp.bfloat16)
    kh = project(k, wk, bk).astype(jnp.bfloat16)
    vh = project(v, wv, bv).astype(jnp.bfloat16)

    # ---- flash-attention core (Pallas).
    ctx = _flash_attention(qh, kh, vh, mask, q_tile=tq, kv_tile=tk)     # (B, M, D) f32

    # ---- output projection as one XLA GEMM (full K=D contraction).
    out = jnp.einsum('bmd,de->bme', ctx.astype(jnp.bfloat16), wo.astype(jnp.bfloat16),
                     preferred_element_type=jnp.float32) + bo
    return out


def _reference(k, v, q, mask, params, num_heads):
    """Pure-JAX reference mirroring the PyTorch forward (eval mode, f32)."""
    B, M, D = k.shape
    hs = D // num_heads
    wk, bk, wv, bv, wq, bq, wo, bo = params
    kp = k @ wk + bk
    vp = v @ wv + bv
    qp = q @ wq + bq
    def split(x):
        return x.reshape(B, M, num_heads, hs).transpose(0, 2, 1, 3)
    kh, vh, qh = split(kp), split(vp), split(qp)
    qh = qh / math.sqrt(hs)
    scores = jnp.einsum('bhmd,bhnd->bhmn', qh, kh)
    scores = jnp.where(mask[:, None, :, :] != 0, scores, -jnp.inf)
    attn = jax.nn.softmax(scores, axis=-1)
    ctx = jnp.einsum('bhmn,bhnd->bhmd', attn, vh)
    ctx = ctx.transpose(0, 2, 1, 3).reshape(B, M, D)
    return ctx @ wo + bo


def _make_inputs(key, B, M, D):
    ks = jax.random.split(key, 12)
    k = jax.random.normal(ks[0], (B, M, D), jnp.float32)
    v = jax.random.normal(ks[1], (B, M, D), jnp.float32)
    q = jax.random.normal(ks[2], (B, M, D), jnp.float32)
    # key mask [B, 1, M]: 1 = attend, 0 = masked; first 5 positions always valid
    # (the kernel's finite mask bias vs. the reference's -inf only diverges for
    # fully-masked rows, which this generator never produces).
    mask = jnp.concatenate(
        [jnp.ones((B, 1, 5), jnp.int32),
         (jax.random.uniform(ks[3], (B, 1, M - 5)) > 0.3).astype(jnp.int32)],
        axis=-1)
    scale = 1.0 / math.sqrt(D)
    def lin(kw, kb):
        w = jax.random.uniform(kw, (D, D), jnp.float32, -scale, scale)
        b = jax.random.uniform(kb, (D,), jnp.float32, -scale, scale)
        return w, b
    wk, bk = lin(ks[4], ks[5])
    wv, bv = lin(ks[6], ks[7])
    wq, bq = lin(ks[8], ks[9])
    wo, bo = lin(ks[10], ks[11])
    return k, v, q, mask, (wk, bk, wv, bv, wq, bq, wo, bo)


if __name__ == "__main__":
    key = jax.random.PRNGKey(0)
    k1, k2 = jax.random.split(key)

    # Small config (single q/kv tile: grid = (2, 1, 1)).
    B, M, D, H = 2, 8, 32, 4
    k, v, q, mask, params = _make_inputs(k1, B, M, D)
    out = jax.block_until_ready(multi_headed_attention(k, v, q, mask, params, H))
    ref = _reference(k, v, q, mask, params, H)
    assert out.shape == (B, M, D)
    assert bool(jnp.isfinite(out).all())
    assert jnp.allclose(out, ref, atol=5e-2, rtol=5e-2), "small-config mismatch"

    # Larger config exercising the flash tiling / online softmax (grid = (1, 2, 2)).
    B2, M2, D2, H2 = 1, 256, 64, 4
    k, v, q, mask, params = _make_inputs(k2, B2, M2, D2)
    out2 = jax.block_until_ready(
        multi_headed_attention(k, v, q, mask, params, H2, q_tile=128, kv_tile=128))
    ref2 = _reference(k, v, q, mask, params, H2)
    assert bool(jnp.isfinite(out2).all())
    assert jnp.allclose(out2, ref2, atol=5e-2, rtol=5e-2), "tiled-config mismatch"

    print("KERNEL_OK")
</pallas_src>

<mosaic_0001>
module attributes {stable_mosaic.version = 11 : i64} {
  func.func @_flash_attn_kernel(%arg0: i32, %arg1: i32, %arg2: i32, %arg3: memref<1x4x8x8xbf16, #tpu.memory_space<vmem>>, %arg4: memref<1x4x8x8xbf16, #tpu.memory_space<vmem>>, %arg5: memref<1x4x8x8xbf16, #tpu.memory_space<vmem>>, %arg6: memref<1x1x8xi32, #tpu.memory_space<vmem>>, %arg7: memref<1x8x32xf32, #tpu.memory_space<vmem>>, %arg8: memref<4x8x1xf32, #tpu.memory_space<vmem>>, %arg9: memref<4x8x1xf32, #tpu.memory_space<vmem>>, %arg10: memref<4x8x8xf32, #tpu.memory_space<vmem>>) attributes {dimension_semantics = [#tpu.dimension_semantics<parallel>, #tpu.dimension_semantics<parallel>, #tpu.dimension_semantics<arbitrary>], iteration_bounds = array<i64: 2, 1, 1>, scalar_prefetch = 0 : i64, scratch_operands = 3 : i64, tpu.core_type = #tpu.core_type<tc>, window_params = [{transform_indices = @transform_0, window_bounds = array<i64: 1, 4, 8, 8>}, {transform_indices = @transform_1, window_bounds = array<i64: 1, 4, 8, 8>}, {transform_indices = @transform_2, window_bounds = array<i64: 1, 4, 8, 8>}, {transform_indices = @transform_3, window_bounds = array<i64: 1, 1, 8>}, {transform_indices = @transform_4, window_bounds = array<i64: 1, 8, 32>}]} {
    %c0_i32 = arith.constant 0 : i32
    %0 = arith.cmpi eq, %arg2, %c0_i32 : i32
    %1 = arith.extui %0 : i1 to i32
    %c0_i32_0 = arith.constant 0 : i32
    %2 = arith.cmpi ne, %1, %c0_i32_0 : i32
    scf.if %2 {
      %cst_40 = arith.constant -1.000000e+30 : f32
      %46 = vector.broadcast %cst_40 : f32 to vector<4x8x1xf32>
      %c0_41 = arith.constant 0 : index
      %c0_42 = arith.constant 0 : index
      %c0_43 = arith.constant 0 : index
      %47 = vector.load %arg8[%c0_41, %c0_42, %c0_43] : memref<4x8x1xf32, #tpu.memory_space<vmem>>, vector<4x8x1xf32>
      tpu.vector_store %arg8[%c0_41, %c0_42, %c0_43], %46 {strides = array<i32>} : memref<4x8x1xf32, #tpu.memory_space<vmem>>, vector<4x8x1xf32>,
      %cst_44 = arith.constant 0.000000e+00 : f32
      %48 = vector.broadcast %cst_44 : f32 to vector<4x8x1xf32>
      %c0_45 = arith.constant 0 : index
      %c0_46 = arith.constant 0 : index
      %c0_47 = arith.constant 0 : index
      %49 = vector.load %arg9[%c0_45, %c0_46, %c0_47] : memref<4x8x1xf32, #tpu.memory_space<vmem>>, vector<4x8x1xf32>
      tpu.vector_store %arg9[%c0_45, %c0_46, %c0_47], %48 {strides = array<i32>} : memref<4x8x1xf32, #tpu.memory_space<vmem>>, vector<4x8x1xf32>,
      %cst_48 = arith.constant 0.000000e+00 : f32
      %50 = vector.broadcast %cst_48 : f32 to vector<4x8x8xf32>
      %c0_49 = arith.constant 0 : index
      %c0_50 = arith.constant 0 : index
      %c0_51 = arith.constant 0 : index
      %51 = vector.load %arg10[%c0_49, %c0_50, %c0_51] : memref<4x8x8xf32, #tpu.memory_space<vmem>>, vector<4x8x8xf32>
      tpu.vector_store %arg10[%c0_49, %c0_50, %c0_51], %50 {strides = array<i32>} : memref<4x8x8xf32, #tpu.memory_space<vmem>>, vector<4x8x8xf32>,
    } else {
    }
    %c0 = arith.constant 0 : index
    %c0_1 = arith.constant 0 : index
    %c0_2 = arith.constant 0 : index
    %c0_3 = arith.constant 0 : index
    %3 = vector.load %arg3[%c0, %c0_1, %c0_2, %c0_3] : memref<1x4x8x8xbf16, #tpu.memory_space<vmem>>, vector<1x4x8x8xbf16>
    %4 = vector.shape_cast %3 : vector<1x4x8x8xbf16> to vector<4x8x8xbf16>
    %c0_4 = arith.constant 0 : index
    %c0_5 = arith.constant 0 : index
    %c0_6 = arith.constant 0 : index
    %c0_7 = arith.constant 0 : index
    %5 = vector.load %arg4[%c0_4, %c0_5, %c0_6, %c0_7] : memref<1x4x8x8xbf16, #tpu.memory_space<vmem>>, vector<1x4x8x8xbf16>
    %6 = vector.shape_cast %5 : vector<1x4x8x8xbf16> to vector<4x8x8xbf16>
    %c0_8 = arith.constant 0 : index
    %c0_9 = arith.constant 0 : index
    %c0_10 = arith.constant 0 : index
    %c0_11 = arith.constant 0 : index
    %7 = vector.load %arg5[%c0_8, %c0_9, %c0_10, %c0_11] : memref<1x4x8x8xbf16, #tpu.memory_space<vmem>>, vector<1x4x8x8xbf16>
    %8 = vector.shape_cast %7 : vector<1x4x8x8xbf16> to vector<4x8x8xbf16>
    "tpu.trace_start"() <{level = 10 : i32, message = "hqd,hkd->hqk"}> : () -> ()
    %cst = arith.constant dense<0.000000e+00> : vector<4x8x8xf32>
    %9 = tpu.matmul %4, %6, %cst {dimension_numbers = #tpu.dot_dimension_numbers<[2], [2], [1], [1], [0, 0, 0, 1, 1, 1], [0], [0]>} : vector<4x8x8xbf16>, vector<4x8x8xbf16>, vector<4x8x8xf32> -> vector<4x8x8xf32>
    "tpu.trace_stop"() : () -> ()
    %c0_12 = arith.constant 0 : index
    %c0_13 = arith.constant 0 : index
    %c0_14 = arith.constant 0 : index
    %10 = vector.load %arg6[%c0_12, %c0_13, %c0_14] : memref<1x1x8xi32, #tpu.memory_space<vmem>>, vector<1x1x8xi32>
    %11 = vector.shape_cast %10 : vector<1x1x8xi32> to vector<1x8xi32>
    %12 = arith.sitofp %11 : vector<1x8xi32> to vector<1x8xf32>
    %cst_15 = arith.constant 1.000000e+00 : f32
    %13 = vector.broadcast %cst_15 : f32 to vector<1x8xf32>
    %14 = arith.subf %12, %13 : vector<1x8xf32>
    %cst_16 = arith.constant 1.000000e+30 : f32
    %15 = vector.broadcast %cst_16 : f32 to vector<1x8xf32>
    %16 = arith.mulf %14, %15 : vector<1x8xf32>
    %17 = vector.shape_cast %16 : vector<1x8xf32> to vector<1x1x8xf32>
    %18 = vector.broadcast %17 : vector<1x1x8xf32> to vector<4x8x8xf32>
    %19 = arith.addf %9, %18 : vector<4x8x8xf32>
    %c0_17 = arith.constant 0 : index
    %c0_18 = arith.constant 0 : index
    %c0_19 = arith.constant 0 : index
    %20 = vector.load %arg8[%c0_17, %c0_18, %c0_19] : memref<4x8x1xf32, #tpu.memory_space<vmem>>, vector<4x8x1xf32>
    %cst_20 = arith.constant dense<0xFF800000> : vector<4x8xf32>
    %21 = vector.multi_reduction <maximumf>, %19, %cst_20 [2] : vector<4x8x8xf32> to vector<4x8xf32>
    %22 = vector.shape_cast %21 : vector<4x8xf32> to vector<4x8x1xf32>
    %23 = arith.maximumf %20, %22 : vector<4x8x1xf32>
    %24 = arith.subf %20, %23 : vector<4x8x1xf32>
    %25 = math.exp %24 : vector<4x8x1xf32>
    %26 = vector.broadcast %23 : vector<4x8x1xf32> to vector<4x8x8xf32>
    %27 = arith.subf %19, %26 : vector<4x8x8xf32>
    %28 = math.exp %27 : vector<4x8x8xf32>
    %c0_21 = arith.constant 0 : index
    %c0_22 = arith.constant 0 : index
    %c0_23 = arith.constant 0 : index
    %29 = vector.load %arg9[%c0_21, %c0_22, %c0_23] : memref<4x8x1xf32, #tpu.memory_space<vmem>>, vector<4x8x1xf32>
    %30 = arith.mulf %25, %29 : vector<4x8x1xf32>
    %cst_24 = arith.constant dense<0.000000e+00> : vector<4x8xf32>
    %31 = vector.multi_reduction <add>, %28, %cst_24 [2] : vector<4x8x8xf32> to vector<4x8xf32>
    %32 = vector.shape_cast %31 : vector<4x8xf32> to vector<4x8x1xf32>
    %33 = arith.addf %30, %32 : vector<4x8x1xf32>
    %c0_25 = arith.constant 0 : index
    %c0_26 = arith.constant 0 : index
    %c0_27 = arith.constant 0 : index
    %34 = vector.load %arg9[%c0_25, %c0_26, %c0_27] : memref<4x8x1xf32, #tpu.memory_space<vmem>>, vector<4x8x1xf32>
    tpu.vector_store %arg9[%c0_25, %c0_26, %c0_27], %33 {strides = array<i32>} : memref<4x8x1xf32, #tpu.memory_space<vmem>>, vector<4x8x1xf32>,
    %c0_28 = arith.constant 0 : index
    %c0_29 = arith.constant 0 : index
    %c0_30 = arith.constant 0 : index
    %35 = vector.load %arg10[%c0_28, %c0_29, %c0_30] : memref<4x8x8xf32, #tpu.memory_space<vmem>>, vector<4x8x8xf32>
    %36 = vector.broadcast %25 : vector<4x8x1xf32> to vector<4x8x8xf32>
    %37 = arith.mulf %36, %35 : vector<4x8x8xf32>
    %38 = arith.truncf %28 : vector<4x8x8xf32> to vector<4x8x8xbf16>
    "tpu.trace_start"() <{level = 10 : i32, message = "hqk,hkd->hqd"}> : () -> ()
    %cst_31 = arith.constant dense<0.000000e+00> : vector<4x8x8xf32>
    %39 = tpu.matmul %38, %8, %cst_31 {dimension_numbers = #tpu.dot_dimension_numbers<[2], [1], [1], [2], [0, 0, 0, 1, 1, 2], [0], [0]>} : vector<4x8x8xbf16>, vector<4x8x8xbf16>, vector<4x8x8xf32> -> vector<4x8x8xf32>
    "tpu.trace_stop"() : () -> ()
    %40 = arith.addf %37, %39 : vector<4x8x8xf32>
    %c0_32 = arith.constant 0 : index
    %c0_33 = arith.constant 0 : index
    %c0_34 = arith.constant 0 : index
    %41 = vector.load %arg10[%c0_32, %c0_33, %c0_34] : memref<4x8x8xf32, #tpu.memory_space<vmem>>, vector<4x8x8xf32>
    tpu.vector_store %arg10[%c0_32, %c0_33, %c0_34], %40 {strides = array<i32>} : memref<4x8x8xf32, #tpu.memory_space<vmem>>, vector<4x8x8xf32>,
    %c0_35 = arith.constant 0 : index
    %c0_36 = arith.constant 0 : index
    %c0_37 = arith.constant 0 : index
    %42 = vector.load %arg8[%c0_35, %c0_36, %c0_37] : memref<4x8x1xf32, #tpu.memory_space<vmem>>, vector<4x8x1xf32>
    tpu.vector_store %arg8[%c0_35, %c0_36, %c0_37], %23 {strides = array<i32>} : memref<4x8x1xf32, #tpu.memory_space<vmem>>, vector<4x8x1xf32>,
    %c0_i32_38 = arith.constant 0 : i32
    %43 = arith.cmpi eq, %arg2, %c0_i32_38 : i32
    %44 = arith.extui %43 : i1 to i32
    %c0_i32_39 = arith.constant 0 : i32
    %45 = arith.cmpi ne, %44, %c0_i32_39 : i32
    scf.if %45 {
      %c0_40 = arith.constant 0 : index
      %c0_41 = arith.constant 0 : index
      %c0_42 = arith.constant 0 : index
      %46 = vector.load %arg10[%c0_40, %c0_41, %c0_42] : memref<4x8x8xf32, #tpu.memory_space<vmem>>, vector<4x8x8xf32>
      %c0_43 = arith.constant 0 : index
      %c0_44 = arith.constant 0 : index
      %c0_45 = arith.constant 0 : index
      %47 = vector.load %arg9[%c0_43, %c0_44, %c0_45] : memref<4x8x1xf32, #tpu.memory_space<vmem>>, vector<4x8x1xf32>
      %48 = tpu.reciprocal %47 {approx = true} : vector<4x8x1xf32> -> vector<4x8x1xf32>
      %49 = vector.broadcast %48 : vector<4x8x1xf32> to vector<4x8x8xf32>
      %50 = arith.mulf %46, %49 : vector<4x8x8xf32>
      %51 = tpu.transpose %50, [1, 0, 2] : vector<4x8x8xf32> -> vector<8x4x8xf32>
      %52 = vector.shape_cast %51 : vector<8x4x8xf32> to vector<8x32xf32>
      %c0_46 = arith.constant 0 : index
      %c0_47 = arith.constant 0 : index
      %c0_48 = arith.constant 0 : index
      %53 = vector.load %arg7[%c0_46, %c0_47, %c0_48] : memref<1x8x32xf32, #tpu.memory_space<vmem>>, vector<1x8x32xf32>
      %54 = vector.shape_cast %53 : vector<1x8x32xf32> to vector<8x32xf32>
      %55 = vector.shape_cast %52 : vector<8x32xf32> to vector<1x8x32xf32>
      tpu.vector_store %arg7[%c0_46, %c0_47, %c0_48], %55 {strides = array<i32>} : memref<1x8x32xf32, #tpu.memory_space<vmem>>, vector<1x8x32xf32>,
    } else {
    }
    return
  }
  func.func @transform_0(%arg0: i32, %arg1: i32, %arg2: i32) -> (i32, i32, i32, i32) {
    %c0_i32 = arith.constant 0 : i32
    %c0_i32_0 = arith.constant 0 : i32
    %c0_i32_1 = arith.constant 0 : i32
    return %arg0, %c0_i32, %arg1, %c0_i32_0 : i32, i32, i32, i32
  }
  func.func @transform_1(%arg0: i32, %arg1: i32, %arg2: i32) -> (i32, i32, i32, i32) {
    %c0_i32 = arith.constant 0 : i32
    %c0_i32_0 = arith.constant 0 : i32
    %c0_i32_1 = arith.constant 0 : i32
    return %arg0, %c0_i32, %arg2, %c0_i32_0 : i32, i32, i32, i32
  }
  func.func @transform_2(%arg0: i32, %arg1: i32, %arg2: i32) -> (i32, i32, i32, i32) {
    %c0_i32 = arith.constant 0 : i32
    %c0_i32_0 = arith.constant 0 : i32
    %c0_i32_1 = arith.constant 0 : i32
    return %arg0, %c0_i32, %arg2, %c0_i32_0 : i32, i32, i32, i32
  }
  func.func @transform_3(%arg0: i32, %arg1: i32, %arg2: i32) -> (i32, i32, i32) {
    %c0_i32 = arith.constant 0 : i32
    %c0_i32_0 = arith.constant 0 : i32
    return %arg0, %c0_i32, %arg2 : i32, i32, i32
  }
  func.func @transform_4(%arg0: i32, %arg1: i32, %arg2: i32) -> (i32, i32, i32) {
    %c0_i32 = arith.constant 0 : i32
    %c0_i32_0 = arith.constant 0 : i32
    return %arg0, %arg1, %c0_i32 : i32, i32, i32
  }
}

</mosaic_0001>

<llo_original>
// kernel: tpu_custom_call.1
$region0: #{tpu_custom_call.1}
  #allocation0 [shape = 'u32[]', space=smem, size = 0x4, offset = 0x4, fixed_abs, tag = 'smem constant byte address 0x4 - core index']
  #allocation1 [shape = 'u32[144,128]{1,0:T(1,128)}', space=vmem, size = 0x12000, scoped, tag = 'internal scratch']
  #allocation2 [shape = 'f32[4,8,1]{2,1,0:T(8,128)}', space=vmem, size = 0x4000, scoped, tag = 'scratch operand']
  #allocation3 [shape = 'f32[4,8,1]{2,1,0:T(8,128)}', space=vmem, size = 0x4000, scoped, tag = 'scratch operand']
  #allocation4 [shape = 'f32[4,8,8]{2,1,0:T(8,128)}', space=vmem, size = 0x4000, scoped, tag = 'scratch operand']
  %s0 = inlined_call_operand.hbm [shape: bf16[2,4,8,8], index: 0, kind: input, shape index: {}]
  %s1 = inlined_call_operand.hbm [shape: bf16[2,4,8,8], index: 1, kind: input, shape index: {}]
  %s2 = inlined_call_operand.hbm [shape: bf16[2,4,8,8], index: 2, kind: input, shape index: {}]
  %s3 = inlined_call_operand.vmem [shape: s32[2,1,8], index: 3, kind: input, shape index: {}]
  %s4 = inlined_call_operand.hbm [shape: f32[2,8,32], index: 4, kind: output, shape index: {}]
  %s5 = sld [smem:[#allocation0]]
  $region69: #{tpu_custom_call.1} parent=0
    _
  %s7 = ssub.s32 1, %s5
  %s8 = scalar_select 0, %s7, %s5
  $region1: #{tpu_custom_call.1} parent=0
    #allocation5 [shape = 'u8[16384]{0}', space=vmem, size = 0x4000, scoped, tag = 'input window, operand 0']
    #allocation6 [shape = 's32[2]{0}', space=sflag, size = 0x8, scoped, tag = 'scoped memory for tpu_custom_call.1']
    #allocation7 [shape = 's32[2]{0}', space=sflag, size = 0x8, scoped, tag = 'scoped memory for tpu_custom_call.1']
    #allocation8 [shape = 'u8[16384]{0}', space=vmem, size = 0x4000, scoped, tag = 'input window, operand 1']
    #allocation9 [shape = 's32[2]{0}', space=sflag, size = 0x8, scoped, tag = 'scoped memory for tpu_custom_call.1']
    #allocation10 [shape = 'u8[16384]{0}', space=vmem, size = 0x4000, scoped, tag = 'input window, operand 2']
    #allocation11 [shape = 'u8[8192]{0}', space=vmem, size = 0x2000, scoped, tag = 'output window, operand 0']
    %9 = vsyncpa [#allocation6], 0
    %s10 = scalar_lea.sflag [#allocation6], 1
    %11 = vsyncpa %s10, 0
    %12 = vsyncpa [#allocation9], 0
    %s13 = scalar_lea.sflag [#allocation9], 1
    %14 = vsyncpa %s13, 0
    %15 = vsyncpa [#allocation7], 0
    %s16 = scalar_lea.sflag [#allocation7], 1
    %17 = vsyncpa %s16, 0
    loop: start=0, step=1, limit=4
    $region2: #{tpu_custom_call.1} parent=1 // loop_pre_header
      _
    $region3: #{tpu_custom_call.1} parent=1 // loop_header
      %s19 = sphi 0, %s23
      %p20 = scmp.ge.s32.totalorder %s19, 4
      %s26 = sphi 0, %s45
      %s27 = sphi 0, %s41
      %s28 = sphi 0, %s37
      %s29 = sphi 0, %s26
      %s30 = sphi 0, %s27
      %s31 = sphi 0, %s28
      %s32 = sphi 0, %s29
      %s33 = sphi 0, %s30
      %s34 = sphi 0, %s31
      %s50 = sphi 0, %s52
      %s53 = sphi 0, %s50
      %s54 = sphi 0, %s53
      %s70 = sphi 0, %s54
      %s78 = sphi 0, %s80
      %s81 = sphi 0, %s78
      %s82 = sphi 0, %s81
      %s98 = sphi 0, %s82
      %s106 = sphi 0, %s108
      %s109 = sphi 0, %s106
      %s110 = sphi 0, %s109
      %s126 = sphi 0, %s110
      %s134 = sphi 0, %s136
      %s137 = sphi 0, %s134
      %s138 = sphi 0, %s137
      %s154 = sphi 0, %s138
      %s162 = sphi 0, %s164
      %s165 = sphi 0, %s162
      %s166 = sphi 0, %s165
      %s182 = sphi 0, %s166
    $region4: #{tpu_custom_call.1} parent=1 // loop_header_branch
      %22 = sbr.rel (%p20) target = $region8
    $region5: #{tpu_custom_call.1} parent=1 // loop_body
      %s24 = ssub.s32 %s19, 1
      %s25 = ssub.s32 %s19, 2
      %s35 = sadd.s32 1, %s28
      %p36 = scmp.ge.s32.totalorder %s35, 1
      %s37 = scalar_select %p36, 0, %s35
      %s38 = sadd.s32 1, %s27
      %s39 = scalar_select %p36, %s38, %s27
      %p40 = scmp.ge.s32.totalorder %s39, 1
      %s41 = scalar_select %p40, 0, %s39
      %s42 = sadd.s32 1, %s26
      %s43 = scalar_select %p40, %s42, %s26
      %p44 = scmp.ge.s32.totalorder %s43, 2
      %s45 = scalar_select %p44, 0, %s43
      %s46 = ssub.s32 %s26, %s45
      %s47 = ssub.s32 %s27, %s41
      %s48 = sor.u32 %s46, %s47
      %p49 = scmp.eq.s32.totalorder %s48, 0
      %s51 = sadd.s32 %s50, 1
      %s52 = scalar_select %p49, %s50, %s51
      %p55 = pneg %p49
      %p56 = scmp.eq.s32.totalorder %s19, 1
      %p57 = por %p55, %p56
      %p58 = scmp.ne.s32.totalorder %s50, %s53
      %p59 = scmp.eq.s32.totalorder %s19, 0
      %p60 = por %p58, %p59
      %p61 = scmp.ne.s32.totalorder %s50, %s53
      %p62 = scmp.eq.s32.totalorder %s24, 1
      %p63 = por %p61, %p62
      %p64 = scmp.ne.s32.totalorder %s53, %s54
      %p65 = scmp.eq.s32.totalorder %s24, 0
      %p66 = por %p64, %p65
      %p67 = scmp.ne.s32.totalorder %s53, %s54
      %p68 = scmp.eq.s32.totalorder %s25, 1
      %p69 = por %p67, %p68
      %p71 = scmp.ne.s32.totalorder %s54, %s70
      %p72 = scmp.eq.s32.totalorder %s25, 0
      %p73 = por %p71, %p72
      %s74 = ssub.s32 %s26, %s45
      %s75 = ssub.s32 %s28, %s37
      %s76 = sor.u32 %s74, %s75
      %p77 = scmp.eq.s32.totalorder %s76, 0
      %s79 = sadd.s32 %s78, 1
      %s80 = scalar_select %p77, %s78, %s79
      %p83 = pneg %p77
      %p84 = scmp.eq.s32.totalorder %s19, 1
      %p85 = por %p83, %p84
      %p86 = scmp.ne.s32.totalorder %s78, %s81
      %p87 = scmp.eq.s32.totalorder %s19, 0
      %p88 = por %p86, %p87
      %p89 = scmp.ne.s32.totalorder %s78, %s81
      %p90 = scmp.eq.s32.totalorder %s24, 1
      %p91 = por %p89, %p90
      %p92 = scmp.ne.s32.totalorder %s81, %s82
      %p93 = scmp.eq.s32.totalorder %s24, 0
      %p94 = por %p92, %p93
      %p95 = scmp.ne.s32.totalorder %s81, %s82
      %p96 = scmp.eq.s32.totalorder %s25, 1
      %p97 = por %p95, %p96
      %p99 = scmp.ne.s32.totalorder %s82, %s98
      %p100 = scmp.eq.s32.totalorder %s25, 0
      %p101 = por %p99, %p100
      %s102 = ssub.s32 %s26, %s45
      %s103 = ssub.s32 %s28, %s37
      %s104 = sor.u32 %s102, %s103
      %p105 = scmp.eq.s32.totalorder %s104, 0
      %s107 = sadd.s32 %s106, 1
      %s108 = scalar_select %p105, %s106, %s107
      %p111 = pneg %p105
      %p112 = scmp.eq.s32.totalorder %s19, 1
      %p113 = por %p111, %p112
      %p114 = scmp.ne.s32.totalorder %s106, %s109
      %p115 = scmp.eq.s32.totalorder %s19, 0
      %p116 = por %p114, %p115
      %p117 = scmp.ne.s32.totalorder %s106, %s109
      %p118 = scmp.eq.s32.totalorder %s24, 1
      %p119 = por %p117, %p118
      %p120 = scmp.ne.s32.totalorder %s109, %s110
      %p121 = scmp.eq.s32.totalorder %s24, 0
      %p122 = por %p120, %p121
      %p123 = scmp.ne.s32.totalorder %s109, %s110
      %p124 = scmp.eq.s32.totalorder %s25, 1
      %p125 = por %p123, %p124
      %p127 = scmp.ne.s32.totalorder %s110, %s126
      %p128 = scmp.eq.s32.totalorder %s25, 0
      %p129 = por %p127, %p128
      %s130 = ssub.s32 %s26, %s45
      %s131 = ssub.s32 %s28, %s37
      %s132 = sor.u32 %s130, %s131
      %p133 = scmp.eq.s32.totalorder %s132, 0
      %s135 = sadd.s32 %s134, 1
      %s136 = scalar_select %p133, %s134, %s135
      %p139 = pneg %p133
      %p140 = scmp.eq.s32.totalorder %s19, 1
      %p141 = por %p139, %p140
      %p142 = scmp.ne.s32.totalorder %s134, %s137
      %p143 = scmp.eq.s32.totalorder %s19, 0
      %p144 = por %p142, %p143
      %p145 = scmp.ne.s32.totalorder %s134, %s137
      %p146 = scmp.eq.s32.totalorder %s24, 1
      %p147 = por %p145, %p146
      %p148 = scmp.ne.s32.totalorder %s137, %s138
      %p149 = scmp.eq.s32.totalorder %s24, 0
      %p150 = por %p148, %p149
      %p151 = scmp.ne.s32.totalorder %s137, %s138
      %p152 = scmp.eq.s32.totalorder %s25, 1
      %p153 = por %p151, %p152
      %p155 = scmp.ne.s32.totalorder %s138, %s154
      %p156 = scmp.eq.s32.totalorder %s25, 0
      %p157 = por %p155, %p156
      %s158 = ssub.s32 %s26, %s45
      %s159 = ssub.s32 %s27, %s41
      %s160 = sor.u32 %s158, %s159
      %p161 = scmp.eq.s32.totalorder %s160, 0
      %s163 = sadd.s32 %s162, 1
      %s164 = scalar_select %p161, %s162, %s163
      %p167 = pneg %p161
      %p168 = scmp.eq.s32.totalorder %s19, 1
      %p169 = por %p167, %p168
      %p170 = scmp.ne.s32.totalorder %s162, %s165
      %p171 = scmp.eq.s32.totalorder %s19, 0
      %p172 = por %p170, %p171
      %p173 = scmp.ne.s32.totalorder %s162, %s165
      %p174 = scmp.eq.s32.totalorder %s24, 1
      %p175 = por %p173, %p174
      %p176 = scmp.ne.s32.totalorder %s165, %s166
      %p177 = scmp.eq.s32.totalorder %s24, 0
      %p178 = por %p176, %p177
      %p179 = scmp.ne.s32.totalorder %s165, %s166
      %p180 = scmp.eq.s32.totalorder %s25, 1
      %p181 = por %p179, %p180
      %p183 = scmp.ne.s32.totalorder %s166, %s182
      %p184 = scmp.eq.s32.totalorder %s25, 0
      %p185 = por %p183, %p184
      %p186 = scmp.le.s32.totalorder 1, %s19
      %p187 = scmp.lt.s32.totalorder %s19, 3
      %p188 = pnand %p186, %p187
      %p189 = pneg %p188
      // Predicated region
      $region9: #{tpu_custom_call.1} parent=5 // pred_check
        _
      $region10: #{tpu_custom_call.1} parent=5 // pred_check_branch
        %191 = sbr.rel (%p188) target = $region12
      $region11: #{tpu_custom_call.1} parent=5 // pred_region
        %s192 = ssub.s32 %s19, 1
      $region12: #{tpu_custom_call.1} parent=5 // pred_fallthru
        _
      %p193 = scmp.lt.s32.totalorder %s19, 2
      // Predicated region
      $region13: #{tpu_custom_call.1} parent=5 // pred_check
        %p194 = pneg %p193
      $region14: #{tpu_custom_call.1} parent=5 // pred_check_branch
        %196 = sbr.rel (%p194) target = $region16
      $region15: #{tpu_custom_call.1} parent=5 // pred_region
        // Predicated region
        $region17: #{tpu_custom_call.1} parent=15 // pred_check
          %p197 = pneg %p60
        $region18: #{tpu_custom_call.1} parent=15 // pred_check_branch
          %199 = sbr.rel (%p197) target = $region20
        $region19: #{tpu_custom_call.1} parent=15 // pred_region
          %s200 = sand.u32 %s50, 1
          %s201 = scalar_lea.sflag [#allocation6], %s200
          %s202 = sand.u32 %s50, 1
          %s203 = smul.addr %s202, 16
          %s204 = scalar_lea.vmem [#allocation5], %s203
          %s206 = ssub.s32 256, 256
          %207 = vsyncadd %s201, %s206
          %s208 = smul.addr %s26, 4
          %s209 = sadd.s32 %s27, %s208
          %s210 = smul.addr %s209, 64
          %s211 = scalar_lea.hbm %s0, %s210
          %s212 = sshll.u32 %s204, 4
          %s213 = int_to_ptr.vmem [resolvable:$true] %s212
          %218 = dma.hbm_to_vmem [thread:$0]  %s211, 256, %s213, %s201, 64, 64, 4
        $region20: #{tpu_custom_call.1} parent=15 // pred_fallthru
          _
        // Predicated region
        $region21: #{tpu_custom_call.1} parent=15 // pred_check
          %p219 = pneg %p88
        $region22: #{tpu_custom_call.1} parent=15 // pred_check_branch
          %221 = sbr.rel (%p219) target = $region24
        $region23: #{tpu_custom_call.1} parent=15 // pred_region
          %s222 = sand.u32 %s19, 1
          %s223 = scalar_lea.sflag [#allocation9], %s222
          %s224 = sand.u32 %s78, 1
          %s225 = smul.addr %s224, 16
          %s226 = scalar_lea.vmem [#allocation8], %s225
          %s228 = ssub.s32 256, 256
          %229 = vsyncadd %s223, %s228
          %s230 = smul.addr %s26, 4
          %s231 = sadd.s32 %s28, %s230
          %s232 = smul.addr %s231, 64
          %s233 = scalar_lea.hbm %s1, %s232
          %s234 = sshll.u32 %s226, 4
          %s235 = int_to_ptr.vmem [resolvable:$true] %s234
          %240 = dma.hbm_to_vmem [thread:$0]  %s233, 256, %s235, %s223, 64, 64, 4
        $region24: #{tpu_custom_call.1} parent=15 // pred_fallthru
          _
        // Predicated region
        $region25: #{tpu_custom_call.1} parent=15 // pred_check
          %p241 = pneg %p116
        $region26: #{tpu_custom_call.1} parent=15 // pred_check_branch
          %243 = sbr.rel (%p241) target = $region28
        $region27: #{tpu_custom_call.1} parent=15 // pred_region
          %s244 = sand.u32 %s19, 1
          %s245 = scalar_lea.sflag [#allocation9], %s244
          %s246 = sand.u32 %s106, 1
          %s247 = smul.addr %s246, 16
          %s248 = scalar_lea.vmem [#allocation10], %s247
          %s250 = ssub.s32 256, 256
          %251 = vsyncadd %s245, %s250
          %s252 = smul.addr %s26, 4
          %s253 = sadd.s32 %s28, %s252
          %s254 = smul.addr %s253, 64
          %s255 = scalar_lea.hbm %s2, %s254
          %s256 = sshll.u32 %s248, 4
          %s257 = int_to_ptr.vmem [resolvable:$true] %s256
          %262 = dma.hbm_to_vmem [thread:$0]  %s255, 256, %s257, %s245, 64, 64, 4
        $region28: #{tpu_custom_call.1} parent=15 // pred_fallthru
          _
        // Predicated region
        $region29: #{tpu_custom_call.1} parent=15 // pred_check
          %p263 = pneg %p144
        $region30: #{tpu_custom_call.1} parent=15 // pred_check_branch
          %265 = sbr.rel (%p263) target = $region32
        $region31: #{tpu_custom_call.1} parent=15 // pred_region
          %p266 = scmp.lt.s32.totalorder %s26, 1
          %s267 = scalar_select %p266, %s26, 1
          %p268 = scmp.lt.s32.totalorder %s28, 0
          %s269 = scalar_select %p268, %s28, 0
          %s270 = sadd.s32 %s269, %s267
          %s271 = scalar_lea.vmem %s3, %s270
        $region32: #{tpu_custom_call.1} parent=15 // pred_fallthru
          _
      $region16: #{tpu_custom_call.1} parent=5 // pred_fallthru
        _
      %p272 = scmp.le.s32.totalorder 1, %s19
      %p273 = scmp.lt.s32.totalorder %s19, 3
      %p274 = pnand %p272, %p273
      %p275 = pneg %p274
      // Predicated region
      $region33: #{tpu_custom_call.1} parent=5 // pred_check
        _
      $region34: #{tpu_custom_call.1} parent=5 // pred_check_branch
        %277 = sbr.rel (%p274) target = $region36
      $region35: #{tpu_custom_call.1} parent=5 // pred_region
        %s278 = ssub.s32 %s19, 1
        %s279 = sand.u32 %s53, 1
        %s280 = scalar_lea.sflag [#allocation6], %s279
        %s281 = sand.u32 %s53, 1
        %s282 = smul.addr %s281, 16
        %s283 = scalar_lea.vmem [#allocation5], %s282
        // Predicated region
        $region37: #{tpu_custom_call.1} parent=35 // pred_check
          %p284 = pneg %p66
        $region38: #{tpu_custom_call.1} parent=35 // pred_check_branch
          %286 = sbr.rel (%p284) target = $region40
        $region39: #{tpu_custom_call.1} parent=35 // pred_region
          %287 = dma.done %s280, 256
        $region40: #{tpu_custom_call.1} parent=35 // pred_fallthru
          _
        %s288 = sand.u32 %s24, 1
        %s289 = scalar_lea.sflag [#allocation9], %s288
        %s290 = sand.u32 %s81, 1
        %s291 = smul.addr %s290, 16
        %s292 = scalar_lea.vmem [#allocation8], %s291
        // Predicated region
        $region41: #{tpu_custom_call.1} parent=35 // pred_check
          %p293 = pneg %p94
        $region42: #{tpu_custom_call.1} parent=35 // pred_check_branch
          %295 = sbr.rel (%p293) target = $region44
        $region43: #{tpu_custom_call.1} parent=35 // pred_region
          %296 = dma.done %s289, 256
        $region44: #{tpu_custom_call.1} parent=35 // pred_fallthru
          _
        %s297 = sand.u32 %s24, 1
        %s298 = scalar_lea.sflag [#allocation9], %s297
        %s299 = sand.u32 %s109, 1
        %s300 = smul.addr %s299, 16
        %s301 = scalar_lea.vmem [#allocation10], %s300
        // Predicated region
        $region45: #{tpu_custom_call.1} parent=35 // pred_check
          %p302 = pneg %p122
        $region46: #{tpu_custom_call.1} parent=35 // pred_check_branch
          %304 = sbr.rel (%p302) target = $region48
        $region47: #{tpu_custom_call.1} parent=35 // pred_region
          %305 = dma.done %s298, 256
        $region48: #{tpu_custom_call.1} parent=35 // pred_fallthru
          _
        %s306 = sand.u32 %s53, 1
        %s307 = scalar_lea.sflag [#allocation6], %s306
        %s308 = sand.u32 %s53, 1
        %s309 = smul.addr %s308, 16
        %s310 = scalar_lea.vmem [#allocation5], %s309
        %p311 = pneg %p66
        %p312 = pneg %p63
        %s313 = sand.u32 %s24, 1
        %s314 = scalar_lea.sflag [#allocation9], %s313
        %s315 = sand.u32 %s81, 1
        %s316 = smul.addr %s315, 16
        %s317 = scalar_lea.vmem [#allocation8], %s316
        %p318 = pneg %p94
        %p319 = pneg %p91
        %s320 = sand.u32 %s24, 1
        %s321 = scalar_lea.sflag [#allocation9], %s320
        %s322 = sand.u32 %s109, 1
        %s323 = smul.addr %s322, 16
        %s324 = scalar_lea.vmem [#allocation10], %s323
        %p325 = pneg %p122
        %p326 = pneg %p119
        %p327 = scmp.lt.s32.totalorder %s29, 1
        %s328 = scalar_select %p327, %s29, 1
        %p329 = scmp.lt.s32.totalorder %s31, 0
        %s330 = scalar_select %p329, %s31, 0
        %s331 = sadd.s32 %s330, %s328
        %s332 = scalar_lea.vmem %s3, %s331
        %p333 = pneg %p150
        %p334 = pneg %p147
        %p335 = pneg %p178
        %p336 = pneg %p175
        %s337 = sand.u32 %s165, 1
        %s338 = scalar_lea.sflag [#allocation7], %s337
        %s339 = sand.u32 %s165, 1
        %s340 = smul.addr %s339, 8
        %s341 = scalar_lea.vmem [#allocation11], %s340
        %p342 = scmp.lt.s32.totalorder %s29, 1
        %s343 = scalar_select %p342, %s29, 1
        %p344 = scmp.lt.s32.totalorder %s31, 0
        %s345 = scalar_select %p344, %s31, 0
        %s346 = sadd.s32 %s345, %s343
        %s347 = scalar_lea.vmem %s3, %s346
        %p349 = scmp.eq.s32.totalorder %s31, 0
        // Predicated region
        $region49: #{tpu_custom_call.1} parent=35 // pred_check
          %p350 = pneg %p349
        $region50: #{tpu_custom_call.1} parent=35 // pred_check_branch
          %352 = sbr.rel (%p350) target = $region52
        $region51: #{tpu_custom_call.1} parent=35 // pred_region
          %vm353 = vcmask 7168
          %354 = vst.msk [vmem:[#allocation2] sm:$0xff] %vm353, -1e+30
          %355 = vst.msk [vmem:[#allocation2 + $0x8] sm:$0xff] %vm353, -1e+30
          %356 = vst.msk [vmem:[#allocation2 + $0x10] sm:$0xff] %vm353, -1e+30
          %357 = vst.msk [vmem:[#allocation2 + $0x18] sm:$0xff] %vm353, -1e+30
          %358 = vst.msk [vmem:[#allocation3] sm:$0xff] %vm353, 0.0
          %359 = vst.msk [vmem:[#allocation3 + $0x8] sm:$0xff] %vm353, 0.0
          %360 = vst.msk [vmem:[#allocation3 + $0x10] sm:$0xff] %vm353, 0.0
          %361 = vst.msk [vmem:[#allocation3 + $0x18] sm:$0xff] %vm353, 0.0
          %vm362 = vcmask 64512
          %363 = vst.msk [vmem:[#allocation4] sm:$0xff] %vm362, 0.0
          %364 = vst.msk [vmem:[#allocation4 + $0x8] sm:$0xff] %vm362, 0.0
          %365 = vst.msk [vmem:[#allocation4 + $0x10] sm:$0xff] %vm362, 0.0
          %366 = vst.msk [vmem:[#allocation4 + $0x18] sm:$0xff] %vm362, 0.0
        $region52: #{tpu_custom_call.1} parent=35 // pred_fallthru
          _
        %v367 = vld [vmem:[%s283] sm:$0xf]
        %v368 = vld [vmem:[%s283 + $0x4] sm:$0xf]
        %v369 = vld [vmem:[%s283 + $0x8] sm:$0xf]
        %v370 = vld [vmem:[%s283 + $0xc] sm:$0xf]
        %v371 = vld [vmem:[%s292] sm:$0xf]
        %v372 = vld [vmem:[%s292 + $0x4] sm:$0xf]
        %v373 = vld [vmem:[%s292 + $0x8] sm:$0xf]
        %v374 = vld [vmem:[%s292 + $0xc] sm:$0xf]
        %v375 = vld [vmem:[%s301] sm:$0xf]
        %v376 = vld [vmem:[%s301 + $0x4] sm:$0xf]
        %v377 = vld [vmem:[%s301 + $0x8] sm:$0xf]
        %v378 = vld [vmem:[%s301 + $0xc] sm:$0xf]
        %v379 = vld [vmem:[%s347] sm:$0x1]
        %v380 = vcvt.s32.f32 %v379
        %v381 = vsub.f32 %v380, 1.0
        %v382 = vmul.f32 %v381, 1e+30
        %v384 = vlaneseq
        %v385 = vshrl.u32 %v384, 7
        %v386 = vsub.s32 0, %v385
        %v387 = vrot.slane %v382, %v386
        %vm389 = vcmask 64512
        %v391 = vsel %vm389, %v367, 0
        %v394 = vsel %vm389, %v371, 0
        %396 = vmatprep.subr.bf16.mxu0 0
        %397 = vmatpush1.bf16.xpose.msra.mxu0 %v394
        %398 = vmatprep.subr.bf16.mxu0 0
        %399 = vmatpush1.bf16.xpose.msra.mxu0 0
        %400 = vmatprep.subr.bf16.mxu0 0
        %401 = vmatpush1.bf16.xpose.msra.mxu0 0
        %402 = vmatprep.subr.bf16.mxu0 0
        %403 = vmatpush1.bf16.xpose.msra.mxu0 0
        %404 = vmatprep.subr.bf16.mxu0 0
        %405 = vmatpush1.bf16.xpose.msra.mxu0 0
        %406 = vmatprep.subr.bf16.mxu0 0
        %407 = vmatpush1.bf16.xpose.msra.mxu0 0
        %408 = vmatprep.subr.bf16.mxu0 0
        %409 = vmatpush1.bf16.xpose.msra.mxu0 0
        %410 = vmatprep.subr.bf16.mxu0 0
        %411 = vmatpush1.bf16.xpose.msra.mxu0 0
        %412 = vmatprep.subr.bf16.mxu0 0
        %413 = vmatpush1.bf16.xpose.msra.mxu0 0
        %414 = vmatprep.subr.bf16.mxu0 0
        %415 = vmatpush1.bf16.xpose.msra.mxu0 0
        %416 = vmatprep.subr.bf16.mxu0 0
        %417 = vmatpush1.bf16.xpose.msra.mxu0 0
        %418 = vmatprep.subr.bf16.mxu0 0
        %419 = vmatpush1.bf16.xpose.msra.mxu0 0
        %420 = vmatprep.subr.bf16.mxu0 0
        %421 = vmatpush1.bf16.xpose.msra.mxu0 0
        %422 = vmatprep.subr.bf16.mxu0 0
        %423 = vmatpush1.bf16.xpose.msra.mxu0 0
        %424 = vmatprep.subr.bf16.mxu0 0
        %425 = vmatpush1.bf16.xpose.msra.mxu0 0
        %426 = vmatprep.subr.bf16.mxu0 0
        %427 = vmatpush1.bf16.xpose.msra.mxu0 0
        %428 = vmatprep.mubr.bf16.mxu0 0
        %429 = vmatmul.mubr.bf16.gmra.mrb[0].mxu0 %v391
        %v430 = vpop.f32.mrb[0].mxu0
        %v431 = vadd.f32 %v387, %v430
        %v432 = vpop.f32.mrb[0].mxu0
        %v433 = vpop.f32.mrb[0].mxu0
        %v434 = vpop.f32.mrb[0].mxu0
        %435 = vdwg.mxu0
        %v437 = vsel %vm389, %v368, 0
        %v440 = vsel %vm389, %v372, 0
        %442 = vmatprep.subr.bf16.mxu0 0
        %443 = vmatpush1.bf16.xpose.msra.mxu0 %v440
        %444 = vmatprep.subr.bf16.mxu0 0
        %445 = vmatpush1.bf16.xpose.msra.mxu0 0
        %446 = vmatprep.subr.bf16.mxu0 0
        %447 = vmatpush1.bf16.xpose.msra.mxu0 0
        %448 = vmatprep.subr.bf16.mxu0 0
        %449 = vmatpush1.bf16.xpose.msra.mxu0 0
        %450 = vmatprep.subr.bf16.mxu0 0
        %451 = vmatpush1.bf16.xpose.msra.mxu0 0
        %452 = vmatprep.subr.bf16.mxu0 0
        %453 = vmatpush1.bf16.xpose.msra.mxu0 0
        %454 = vmatprep.subr.bf16.mxu0 0
        %455 = vmatpush1.bf16.xpose.msra.mxu0 0
        %456 = vmatprep.subr.bf16.mxu0 0
        %457 = vmatpush1.bf16.xpose.msra.mxu0 0
        %458 = vmatprep.subr.bf16.mxu0 0
        %459 = vmatpush1.bf16.xpose.msra.mxu0 0
        %460 = vmatprep.subr.bf16.mxu0 0
        %461 = vmatpush1.bf16.xpose.msra.mxu0 0
        %462 = vmatprep.subr.bf16.mxu0 0
        %463 = vmatpush1.bf16.xpose.msra.mxu0 0
        %464 = vmatprep.subr.bf16.mxu0 0
        %465 = vmatpush1.bf16.xpose.msra.mxu0 0
        %466 = vmatprep.subr.bf16.mxu0 0
        %467 = vmatpush1.bf16.xpose.msra.mxu0 0
        %468 = vmatprep.subr.bf16.mxu0 0
        %469 = vmatpush1.bf16.xpose.msra.mxu0 0
        %470 = vmatprep.subr.bf16.mxu0 0
        %471 = vmatpush1.bf16.xpose.msra.mxu0 0
        %472 = vmatprep.subr.bf16.mxu0 0
        %473 = vmatpush1.bf16.xpose.msra.mxu0 0
        %474 = vmatprep.mubr.bf16.mxu0 0
        %475 = vmatmul.mubr.bf16.gmra.mrb[0].mxu0 %v437
        %v476 = vpop.f32.mrb[0].mxu0
        %v477 = vadd.f32 %v387, %v476
        %v478 = vpop.f32.mrb[0].mxu0
        %v479 = vpop.f32.mrb[0].mxu0
        %v480 = vpop.f32.mrb[0].mxu0
        %481 = vdwg.mxu0
        %v483 = vsel %vm389, %v369, 0
        %v486 = vsel %vm389, %v373, 0
        %488 = vmatprep.subr.bf16.mxu0 0
        %489 = vmatpush1.bf16.xpose.msra.mxu0 %v486
        %490 = vmatprep.subr.bf16.mxu0 0
        %491 = vmatpush1.bf16.xpose.msra.mxu0 0
        %492 = vmatprep.subr.bf16.mxu0 0
        %493 = vmatpush1.bf16.xpose.msra.mxu0 0
        %494 = vmatprep.subr.bf16.mxu0 0
        %495 = vmatpush1.bf16.xpose.msra.mxu0 0
        %496 = vmatprep.subr.bf16.mxu0 0
        %497 = vmatpush1.bf16.xpose.msra.mxu0 0
        %498 = vmatprep.subr.bf16.mxu0 0
        %499 = vmatpush1.bf16.xpose.msra.mxu0 0
        %500 = vmatprep.subr.bf16.mxu0 0
        %501 = vmatpush1.bf16.xpose.msra.mxu0 0
        %502 = vmatprep.subr.bf16.mxu0 0
        %503 = vmatpush1.bf16.xpose.msra.mxu0 0
        %504 = vmatprep.subr.bf16.mxu0 0
        %505 = vmatpush1.bf16.xpose.msra.mxu0 0
        %506 = vmatprep.subr.bf16.mxu0 0
        %507 = vmatpush1.bf16.xpose.msra.mxu0 0
        %508 = vmatprep.subr.bf16.mxu0 0
        %509 = vmatpush1.bf16.xpose.msra.mxu0 0
        %510 = vmatprep.subr.bf16.mxu0 0
        %511 = vmatpush1.bf16.xpose.msra.mxu0 0
        %512 = vmatprep.subr.bf16.mxu0 0
        %513 = vmatpush1.bf16.xpose.msra.mxu0 0
        %514 = vmatprep.subr.bf16.mxu0 0
        %515 = vmatpush1.bf16.xpose.msra.mxu0 0
        %516 = vmatprep.subr.bf16.mxu0 0
        %517 = vmatpush1.bf16.xpose.msra.mxu0 0
        %518 = vmatprep.subr.bf16.mxu0 0
        %519 = vmatpush1.bf16.xpose.msra.mxu0 0
        %520 = vmatprep.mubr.bf16.mxu0 0
        %521 = vmatmul.mubr.bf16.gmra.mrb[0].mxu0 %v483
        %v522 = vpop.f32.mrb[0].mxu0
        %v523 = vadd.f32 %v387, %v522
        %v524 = vpop.f32.mrb[0].mxu0
        %v525 = vpop.f32.mrb[0].mxu0
        %v526 = vpop.f32.mrb[0].mxu0
        %527 = vdwg.mxu0
        %v529 = vsel %vm389, %v370, 0
        %v532 = vsel %vm389, %v374, 0
        %534 = vmatprep.subr.bf16.mxu0 0
        %535 = vmatpush1.bf16.xpose.msra.mxu0 %v532
        %536 = vmatprep.subr.bf16.mxu0 0
        %537 = vmatpush1.bf16.xpose.msra.mxu0 0
        %538 = vmatprep.subr.bf16.mxu0 0
        %539 = vmatpush1.bf16.xpose.msra.mxu0 0
        %540 = vmatprep.subr.bf16.mxu0 0
        %541 = vmatpush1.bf16.xpose.msra.mxu0 0
        %542 = vmatprep.subr.bf16.mxu0 0
        %543 = vmatpush1.bf16.xpose.msra.mxu0 0
        %544 = vmatprep.subr.bf16.mxu0 0
        %545 = vmatpush1.bf16.xpose.msra.mxu0 0
        %546 = vmatprep.subr.bf16.mxu0 0
        %547 = vmatpush1.bf16.xpose.msra.mxu0 0
        %548 = vmatprep.subr.bf16.mxu0 0
        %549 = vmatpush1.bf16.xpose.msra.mxu0 0
        %550 = vmatprep.subr.bf16.mxu0 0
        %551 = vmatpush1.bf16.xpose.msra.mxu0 0
        %552 = vmatprep.subr.bf16.mxu0 0
        %553 = vmatpush1.bf16.xpose.msra.mxu0 0
        %554 = vmatprep.subr.bf16.mxu0 0
        %555 = vmatpush1.bf16.xpose.msra.mxu0 0
        %556 = vmatprep.subr.bf16.mxu0 0
        %557 = vmatpush1.bf16.xpose.msra.mxu0 0
        %558 = vmatprep.subr.bf16.mxu0 0
        %559 = vmatpush1.bf16.xpose.msra.mxu0 0
        %560 = vmatprep.subr.bf16.mxu0 0
        %561 = vmatpush1.bf16.xpose.msra.mxu0 0
        %562 = vmatprep.subr.bf16.mxu0 0
        %563 = vmatpush1.bf16.xpose.msra.mxu0 0
        %564 = vmatprep.subr.bf16.mxu0 0
        %565 = vmatpush1.bf16.xpose.msra.mxu0 0
        %566 = vmatprep.mubr.bf16.mxu0 0
        %567 = vmatmul.mubr.bf16.gmra.mrb[0].mxu0 %v529
        %v568 = vpop.f32.mrb[0].mxu0
        %v569 = vadd.f32 %v387, %v568
        %v570 = vpop.f32.mrb[0].mxu0
        %v571 = vpop.f32.mrb[0].mxu0
        %v572 = vpop.f32.mrb[0].mxu0
        %573 = vdwg.mxu0
        %v574 = vld [vmem:[#allocation2] sm:$0xff]
        %v575 = vld [vmem:[#allocation2 + $0x8] sm:$0xff]
        %v576 = vld [vmem:[#allocation2 + $0x10] sm:$0xff]
        %v577 = vld [vmem:[#allocation2 + $0x18] sm:$0xff]
        %v578 = vsel %vm389, %v431, -inf
        %579 = vmax.xlane.f32.xlu0 %v578
        %v580 = vpop.xlane.xlu0 %579
        %v581 = vsel %vm389, %v477, -inf
        %582 = vmax.xlane.f32.xlu0 %v581
        %v583 = vpop.xlane.xlu0 %582
        %v584 = vsel %vm389, %v523, -inf
        %585 = vmax.xlane.f32.xlu0 %v584
        %v586 = vpop.xlane.xlu0 %585
        %v587 = vsel %vm389, %v569, -inf
        %588 = vmax.xlane.f32.xlu0 %v587
        %v589 = vpop.xlane.xlu0 %588
        %v590 = vmax.f32 %v574, %v580
        %v591 = vmax.f32 %v575, %v583
        %v592 = vmax.f32 %v576, %v586
        %v593 = vmax.f32 %v577, %v589
        %v594 = vsub.f32 %v574, %v590
        %v595 = vsub.f32 %v575, %v591
        %v596 = vsub.f32 %v576, %v592
        %v597 = vsub.f32 %v577, %v593
        %v598 = vmul.f32 %v594, 1.442695
        %v599 = vpow.pop %v598
        %v600 = vmul.f32 %v595, 1.442695
        %v601 = vpow.pop %v600
        %v602 = vmul.f32 %v596, 1.442695
        %v603 = vpow.pop %v602
        %v604 = vmul.f32 %v597, 1.442695
        %v605 = vpow.pop %v604
        %607 = vset.pattern.permute.xlu0 0
        %608 = vperm.xlu0 %607, %v590
        %v609 = vpop.permute.xlu0 %608
        %612 = vset.pattern.permute.xlu0 0
        %613 = vperm.xlu0 %612, %v591
        %v614 = vpop.permute.xlu0 %613
        %617 = vset.pattern.permute.xlu0 0
        %618 = vperm.xlu0 %617, %v592
        %v619 = vpop.permute.xlu0 %618
        %622 = vset.pattern.permute.xlu0 0
        %623 = vperm.xlu0 %622, %v593
        %v624 = vpop.permute.xlu0 %623
        %v626 = vsub.f32 %v431, %v609
        %v627 = vsub.f32 %v477, %v614
        %v628 = vsub.f32 %v523, %v619
        %v629 = vsub.f32 %v569, %v624
        %v630 = vmul.f32 %v626, 1.442695
        %v631 = vpow.pop %v630
        %v632 = vmul.f32 %v627, 1.442695
        %v633 = vpow.pop %v632
        %v634 = vmul.f32 %v628, 1.442695
        %v635 = vpow.pop %v634
        %v636 = vmul.f32 %v629, 1.442695
        %v637 = vpow.pop %v636
        %v638 = vld [vmem:[#allocation3] sm:$0xff]
        %v639 = vld [vmem:[#allocation3 + $0x8] sm:$0xff]
        %v640 = vld [vmem:[#allocation3 + $0x10] sm:$0xff]
        %v641 = vld [vmem:[#allocation3 + $0x18] sm:$0xff]
        %v642 = vmul.f32 %v599, %v638
        %v643 = vmul.f32 %v601, %v639
        %v644 = vmul.f32 %v603, %v640
        %v645 = vmul.f32 %v605, %v641
        %v646 = vsel %vm389, %v631, 0.0
        %647 = vadd.xlane.f32.xlu0 %v646
        %v648 = vpop.xlane.xlu0 %647
        %v649 = vsel %vm389, %v633, 0.0
        %650 = vadd.xlane.f32.xlu0 %v649
        %v651 = vpop.xlane.xlu0 %650
        %v652 = vsel %vm389, %v635, 0.0
        %653 = vadd.xlane.f32.xlu0 %v652
        %v654 = vpop.xlane.xlu0 %653
        %v655 = vsel %vm389, %v637, 0.0
        %656 = vadd.xlane.f32.xlu0 %v655
        %v657 = vpop.xlane.xlu0 %656
        %v658 = vadd.f32 %v642, %v648
        %v659 = vadd.f32 %v643, %v651
        %v660 = vadd.f32 %v644, %v654
        %v661 = vadd.f32 %v645, %v657
        %vm662 = vcmask 7168
        %663 = vst.msk [vmem:[#allocation3] sm:$0xff] %vm662, %v658
        %664 = vst.msk [vmem:[#allocation3 + $0x8] sm:$0xff] %vm662, %v659
        %665 = vst.msk [vmem:[#allocation3 + $0x10] sm:$0xff] %vm662, %v660
        %666 = vst.msk [vmem:[#allocation3 + $0x18] sm:$0xff] %vm662, %v661
        %v667 = vld [vmem:[#allocation4] sm:$0xff]
        %v668 = vld [vmem:[#allocation4 + $0x8] sm:$0xff]
        %v669 = vld [vmem:[#allocation4 + $0x10] sm:$0xff]
        %v670 = vld [vmem:[#allocation4 + $0x18] sm:$0xff]
        %672 = vset.pattern.permute.xlu0 0
        %673 = vperm.xlu0 %672, %v599
        %v674 = vpop.permute.xlu0 %673
        %677 = vset.pattern.permute.xlu0 0
        %678 = vperm.xlu0 %677, %v601
        %v679 = vpop.permute.xlu0 %678
        %682 = vset.pattern.permute.xlu0 0
        %683 = vperm.xlu0 %682, %v603
        %v684 = vpop.permute.xlu0 %683
        %687 = vset.pattern.permute.xlu0 0
        %688 = vperm.xlu0 %687, %v605
        %v689 = vpop.permute.xlu0 %688
        %v691 = vmul.f32 %v674, %v667
        %v692 = vmul.f32 %v679, %v668
        %v693 = vmul.f32 %v684, %v669
        %v694 = vmul.f32 %v689, %v670
        %v695 = vpack.c.bf16 %v631, %v631
        %v696 = vpack.c.bf16 %v633, %v633
        %v697 = vpack.c.bf16 %v635, %v635
        %v698 = vpack.c.bf16 %v637, %v637
        %v700 = vsel %vm389, %v695, 0
        %vm702 = vcmask 1043456
        %v704 = vsel %vm702, %v375, 0
        %706 = vmatprep.subr.bf16.mxu0 0
        %707 = vmatpush1.bf16.msra.mxu0 %v704
        %708 = vmatprep.subr.bf16.mxu0 0
        %709 = vmatpush1.bf16.msra.mxu0 0
        %710 = vmatprep.subr.bf16.mxu0 0
        %711 = vmatpush1.bf16.msra.mxu0 0
        %712 = vmatprep.subr.bf16.mxu0 0
        %713 = vmatpush1.bf16.msra.mxu0 0
        %714 = vmatprep.subr.bf16.mxu0 0
        %715 = vmatpush1.bf16.msra.mxu0 0
        %716 = vmatprep.subr.bf16.mxu0 0
        %717 = vmatpush1.bf16.msra.mxu0 0
        %718 = vmatprep.subr.bf16.mxu0 0
        %719 = vmatpush1.bf16.msra.mxu0 0
        %720 = vmatprep.subr.bf16.mxu0 0
        %721 = vmatpush1.bf16.msra.mxu0 0
        %722 = vmatprep.subr.bf16.mxu0 0
        %723 = vmatpush1.bf16.msra.mxu0 0
        %724 = vmatprep.subr.bf16.mxu0 0
        %725 = vmatpush1.bf16.msra.mxu0 0
        %726 = vmatprep.subr.bf16.mxu0 0
        %727 = vmatpush1.bf16.msra.mxu0 0
        %728 = vmatprep.subr.bf16.mxu0 0
        %729 = vmatpush1.bf16.msra.mxu0 0
        %730 = vmatprep.subr.bf16.mxu0 0
        %731 = vmatpush1.bf16.msra.mxu0 0
        %732 = vmatprep.subr.bf16.mxu0 0
        %733 = vmatpush1.bf16.msra.mxu0 0
        %734 = vmatprep.subr.bf16.mxu0 0
        %735 = vmatpush1.bf16.msra.mxu0 0
        %736 = vmatprep.subr.bf16.mxu0 0
        %737 = vmatpush1.bf16.msra.mxu0 0
        %738 = vmatprep.mubr.bf16.mxu0 0
        %739 = vmatmul.mubr.bf16.gmra.mrb[0].mxu0 %v700
        %v740 = vpop.f32.mrb[0].mxu0
        %v741 = vadd.f32 0.0, %v740
        %v742 = vpop.f32.mrb[0].mxu0
        %v743 = vpop.f32.mrb[0].mxu0
        %v744 = vpop.f32.mrb[0].mxu0
        %745 = vdwg.mxu0
        %v747 = vsel %vm389, %v696, 0
        %v750 = vsel %vm702, %v376, 0
        %752 = vmatprep.subr.bf16.mxu0 0
        %753 = vmatpush1.bf16.msra.mxu0 %v750
        %754 = vmatprep.subr.bf16.mxu0 0
        %755 = vmatpush1.bf16.msra.mxu0 0
        %756 = vmatprep.subr.bf16.mxu0 0
        %757 = vmatpush1.bf16.msra.mxu0 0
        %758 = vmatprep.subr.bf16.mxu0 0
        %759 = vmatpush1.bf16.msra.mxu0 0
        %760 = vmatprep.subr.bf16.mxu0 0
        %761 = vmatpush1.bf16.msra.mxu0 0
        %762 = vmatprep.subr.bf16.mxu0 0
        %763 = vmatpush1.bf16.msra.mxu0 0
        %764 = vmatprep.subr.bf16.mxu0 0
        %765 = vmatpush1.bf16.msra.mxu0 0
        %766 = vmatprep.subr.bf16.mxu0 0
        %767 = vmatpush1.bf16.msra.mxu0 0
        %768 = vmatprep.subr.bf16.mxu0 0
        %769 = vmatpush1.bf16.msra.mxu0 0
        %770 = vmatprep.subr.bf16.mxu0 0
        %771 = vmatpush1.bf16.msra.mxu0 0
        %772 = vmatprep.subr.bf16.mxu0 0
        %773 = vmatpush1.bf16.msra.mxu0 0
        %774 = vmatprep.subr.bf16.mxu0 0
        %775 = vmatpush1.bf16.msra.mxu0 0
        %776 = vmatprep.subr.bf16.mxu0 0
        %777 = vmatpush1.bf16.msra.mxu0 0
        %778 = vmatprep.subr.bf16.mxu0 0
        %779 = vmatpush1.bf16.msra.mxu0 0
        %780 = vmatprep.subr.bf16.mxu0 0
        %781 = vmatpush1.bf16.msra.mxu0 0
        %782 = vmatprep.subr.bf16.mxu0 0
        %783 = vmatpush1.bf16.msra.mxu0 0
        %784 = vmatprep.mubr.bf16.mxu0 0
        %785 = vmatmul.mubr.bf16.gmra.mrb[0].mxu0 %v747
        %v786 = vpop.f32.mrb[0].mxu0
        %v787 = vadd.f32 0.0, %v786
        %v788 = vpop.f32.mrb[0].mxu0
        %v789 = vpop.f32.mrb[0].mxu0
        %v790 = vpop.f32.mrb[0].mxu0
        %791 = vdwg.mxu0
        %v793 = vsel %vm389, %v697, 0
        %v796 = vsel %vm702, %v377, 0
        %798 = vmatprep.subr.bf16.mxu0 0
        %799 = vmatpush1.bf16.msra.mxu0 %v796
        %800 = vmatprep.subr.bf16.mxu0 0
        %801 = vmatpush1.bf16.msra.mxu0 0
        %802 = vmatprep.subr.bf16.mxu0 0
        %803 = vmatpush1.bf16.msra.mxu0 0
        %804 = vmatprep.subr.bf16.mxu0 0
        %805 = vmatpush1.bf16.msra.mxu0 0
        %806 = vmatprep.subr.bf16.mxu0 0
        %807 = vmatpush1.bf16.msra.mxu0 0
        %808 = vmatprep.subr.bf16.mxu0 0
        %809 = vmatpush1.bf16.msra.mxu0 0
        %810 = vmatprep.subr.bf16.mxu0 0
        %811 = vmatpush1.bf16.msra.mxu0 0
        %812 = vmatprep.subr.bf16.mxu0 0
        %813 = vmatpush1.bf16.msra.mxu0 0
        %814 = vmatprep.subr.bf16.mxu0 0
        %815 = vmatpush1.bf16.msra.mxu0 0
        %816 = vmatprep.subr.bf16.mxu0 0
        %817 = vmatpush1.bf16.msra.mxu0 0
        %818 = vmatprep.subr.bf16.mxu0 0
        %819 = vmatpush1.bf16.msra.mxu0 0
        %820 = vmatprep.subr.bf16.mxu0 0
        %821 = vmatpush1.bf16.msra.mxu0 0
        %822 = vmatprep.subr.bf16.mxu0 0
        %823 = vmatpush1.bf16.msra.mxu0 0
        %824 = vmatprep.subr.bf16.mxu0 0
        %825 = vmatpush1.bf16.msra.mxu0 0
        %826 = vmatprep.subr.bf16.mxu0 0
        %827 = vmatpush1.bf16.msra.mxu0 0
        %828 = vmatprep.subr.bf16.mxu0 0
        %829 = vmatpush1.bf16.msra.mxu0 0
        %830 = vmatprep.mubr.bf16.mxu0 0
        %831 = vmatmul.mubr.bf16.gmra.mrb[0].mxu0 %v793
        %v832 = vpop.f32.mrb[0].mxu0
        %v833 = vadd.f32 0.0, %v832
        %v834 = vpop.f32.mrb[0].mxu0
        %v835 = vpop.f32.mrb[0].mxu0
        %v836 = vpop.f32.mrb[0].mxu0
        %837 = vdwg.mxu0
        %v839 = vsel %vm389, %v698, 0
        %v842 = vsel %vm702, %v378, 0
        %844 = vmatprep.subr.bf16.mxu0 0
        %845 = vmatpush1.bf16.msra.mxu0 %v842
        %846 = vmatprep.subr.bf16.mxu0 0
        %847 = vmatpush1.bf16.msra.mxu0 0
        %848 = vmatprep.subr.bf16.mxu0 0
        %849 = vmatpush1.bf16.msra.mxu0 0
        %850 = vmatprep.subr.bf16.mxu0 0
        %851 = vmatpush1.bf16.msra.mxu0 0
        %852 = vmatprep.subr.bf16.mxu0 0
        %853 = vmatpush1.bf16.msra.mxu0 0
        %854 = vmatprep.subr.bf16.mxu0 0
        %855 = vmatpush1.bf16.msra.mxu0 0
        %856 = vmatprep.subr.bf16.mxu0 0
        %857 = vmatpush1.bf16.msra.mxu0 0
        %858 = vmatprep.subr.bf16.mxu0 0
        %859 = vmatpush1.bf16.msra.mxu0 0
        %860 = vmatprep.subr.bf16.mxu0 0
        %861 = vmatpush1.bf16.msra.mxu0 0
        %862 = vmatprep.subr.bf16.mxu0 0
        %863 = vmatpush1.bf16.msra.mxu0 0
        %864 = vmatprep.subr.bf16.mxu0 0
        %865 = vmatpush1.bf16.msra.mxu0 0
        %866 = vmatprep.subr.bf16.mxu0 0
        %867 = vmatpush1.bf16.msra.mxu0 0
        %868 = vmatprep.subr.bf16.mxu0 0
        %869 = vmatpush1.bf16.msra.mxu0 0
        %870 = vmatprep.subr.bf16.mxu0 0
        %871 = vmatpush1.bf16.msra.mxu0 0
        %872 = vmatprep.subr.bf16.mxu0 0
        %873 = vmatpush1.bf16.msra.mxu0 0
        %874 = vmatprep.subr.bf16.mxu0 0
        %875 = vmatpush1.bf16.msra.mxu0 0
        %876 = vmatprep.mubr.bf16.mxu0 0
        %877 = vmatmul.mubr.bf16.gmra.mrb[0].mxu0 %v839
        %v878 = vpop.f32.mrb[0].mxu0
        %v879 = vadd.f32 0.0, %v878
        %v880 = vpop.f32.mrb[0].mxu0
        %v881 = vpop.f32.mrb[0].mxu0
        %v882 = vpop.f32.mrb[0].mxu0
        %883 = vdwg.mxu0
        %v884 = vadd.f32 %v691, %v741
        %v885 = vadd.f32 %v692, %v787
        %v886 = vadd.f32 %v693, %v833
        %v887 = vadd.f32 %v694, %v879
        %888 = vst.msk [vmem:[#allocation4] sm:$0xff] %vm389, %v884
        %889 = vst.msk [vmem:[#allocation4 + $0x8] sm:$0xff] %vm389, %v885
        %890 = vst.msk [vmem:[#allocation4 + $0x10] sm:$0xff] %vm389, %v886
        %891 = vst.msk [vmem:[#allocation4 + $0x18] sm:$0xff] %vm389, %v887
        %892 = vst.msk [vmem:[#allocation2] sm:$0xff] %vm662, %v590
        %893 = vst.msk [vmem:[#allocation2 + $0x8] sm:$0xff] %vm662, %v591
        %894 = vst.msk [vmem:[#allocation2 + $0x10] sm:$0xff] %vm662, %v592
        %895 = vst.msk [vmem:[#allocation2 + $0x18] sm:$0xff] %vm662, %v593
        // Predicated region
        $region53: #{tpu_custom_call.1} parent=35 // pred_check
          %p896 = pneg %p349
        $region54: #{tpu_custom_call.1} parent=35 // pred_check_branch
          %898 = sbr.rel (%p896) target = $region56
        $region55: #{tpu_custom_call.1} parent=35 // pred_region
          %v899 = vld [vmem:[#allocation4] sm:$0xff]
          %v900 = vld [vmem:[#allocation4 + $0x8] sm:$0xff]
          %v901 = vld [vmem:[#allocation4 + $0x10] sm:$0xff]
          %v902 = vld [vmem:[#allocation4 + $0x18] sm:$0xff]
          %v903 = vld [vmem:[#allocation3] sm:$0xff]
          %v904 = vld [vmem:[#allocation3 + $0x8] sm:$0xff]
          %v905 = vld [vmem:[#allocation3 + $0x10] sm:$0xff]
          %v906 = vld [vmem:[#allocation3 + $0x18] sm:$0xff]
          %v907 = vrcp.pop %v903
          %v908 = vrcp.pop %v904
          %v909 = vrcp.pop %v905
          %v910 = vrcp.pop %v906
          %912 = vset.pattern.permute.xlu0 0
          %913 = vperm.xlu0 %912, %v907
          %v914 = vpop.permute.xlu0 %913
          %917 = vset.pattern.permute.xlu0 0
          %918 = vperm.xlu0 %917, %v908
          %v919 = vpop.permute.xlu0 %918
          %922 = vset.pattern.permute.xlu0 0
          %923 = vperm.xlu0 %922, %v909
          %v924 = vpop.permute.xlu0 %923
          %927 = vset.pattern.permute.xlu0 0
          %928 = vperm.xlu0 %927, %v910
          %v929 = vpop.permute.xlu0 %928
          %v931 = vmul.f32 %v899, %v914
          %v932 = vmul.f32 %v900, %v919
          %v933 = vmul.f32 %v901, %v924
          %v934 = vmul.f32 %v902, %v929
          %v935 = vcombine.low %v931, %v933
          %v936 = vcombine.high %v931, %v933
          %v938 = vunpack.c.l.s4 1983009808
          %v939 = vunpack.c.0.s8 %v938
          %v940 = vlaneseq
          %v941 = vshrl.u32 %v940, 7
          %v942 = vsub.s32 %v939, %v941
          %v943 = vrot.slane %v935, %v942
          %v945 = vunpack.c.l.s4 1983009808
          %v946 = vunpack.c.0.s8 %v945
          %v947 = vlaneseq
          %v948 = vshrl.u32 %v947, 7
          %v949 = vsub.s32 %v946, %v948
          %v950 = vrot.slane %v936, %v949
          %v951 = vcombine.low %v932, %v934
          %v952 = vcombine.high %v932, %v934
          %v954 = vunpack.c.l.s4 1983009808
          %v955 = vunpack.c.0.s8 %v954
          %v956 = vlaneseq
          %v957 = vshrl.u32 %v956, 7
          %v958 = vsub.s32 %v955, %v957
          %v959 = vrot.slane %v951, %v958
          %v961 = vunpack.c.l.s4 1983009808
          %v962 = vunpack.c.0.s8 %v961
          %v963 = vlaneseq
          %v964 = vshrl.u32 %v963, 7
          %v965 = vsub.s32 %v962, %v964
          %v966 = vrot.slane %v952, %v965
          %v967 = vcombine.low %v943, %v959
          %v968 = vcombine.high %v943, %v959
          %v970 = vunpack.c.l.s4 1934713408
          %v971 = vunpack.c.0.s8 %v970
          %v972 = vlaneseq
          %v973 = vshrl.u32 %v972, 7
          %v974 = vsub.s32 %v971, %v973
          %v975 = vrot.slane %v967, %v974
          %v977 = vunpack.c.l.s4 1934713408
          %v978 = vunpack.c.0.s8 %v977
          %v979 = vlaneseq
          %v980 = vshrl.u32 %v979, 7
          %v981 = vsub.s32 %v978, %v980
          %v982 = vrot.slane %v968, %v981
          %v983 = vcombine.low %v950, %v966
          %v984 = vcombine.high %v950, %v966
          %v986 = vunpack.c.l.s4 1934713408
          %v987 = vunpack.c.0.s8 %v986
          %v988 = vlaneseq
          %v989 = vshrl.u32 %v988, 7
          %v990 = vsub.s32 %v987, %v989
          %v991 = vrot.slane %v983, %v990
          %v993 = vunpack.c.l.s4 1934713408
          %v994 = vunpack.c.0.s8 %v993
          %v995 = vlaneseq
          %v996 = vshrl.u32 %v995, 7
          %v997 = vsub.s32 %v994, %v996
          %v998 = vrot.slane %v984, %v997
          %v999 = vcombine.high %v975, 0.0
          %v1000 = vcombine.high %v982, 0.0
          %v1001 = vcombine.high %v991, 0.0
          %v1002 = vcombine.high %v998, 0.0
          %v1003 = vcombine.low %v975, %v982
          %v1005 = vunpack.c.l.s4 1983009808
          %v1006 = vunpack.c.0.s8 %v1005
          %v1007 = vlaneseq
          %v1008 = vshrl.u32 %v1007, 7
          %v1009 = vsub.s32 %v1006, %v1008
          %v1010 = vrot.slane %v1003, %v1009
          %v1011 = vcombine.low %v999, %v1000
          %v1013 = vunpack.c.l.s4 1983009808
          %v1014 = vunpack.c.0.s8 %v1013
          %v1015 = vlaneseq
          %v1016 = vshrl.u32 %v1015, 7
          %v1017 = vsub.s32 %v1014, %v1016
          %v1018 = vrot.slane %v1011, %v1017
          %v1019 = vcombine.low %v991, %v998
          %v1021 = vunpack.c.l.s4 1983009808
          %v1022 = vunpack.c.0.s8 %v1021
          %v1023 = vlaneseq
          %v1024 = vshrl.u32 %v1023, 7
          %v1025 = vsub.s32 %v1022, %v1024
          %v1026 = vrot.slane %v1019, %v1025
          %v1027 = vcombine.low %v1001, %v1002
          %v1029 = vunpack.c.l.s4 1983009808
          %v1030 = vunpack.c.0.s8 %v1029
          %v1031 = vlaneseq
          %v1032 = vshrl.u32 %v1031, 7
          %v1033 = vsub.s32 %v1030, %v1032
          %v1034 = vrot.slane %v1027, %v1033
          %v1035 = vcombine.low %v1010, %v1018
          %v1036 = vcombine.high %v1010, %v1018
          %v1038 = vunpack.c.l.s4 1934713408
          %v1039 = vunpack.c.0.s8 %v1038
          %v1040 = vlaneseq
          %v1041 = vshrl.u32 %v1040, 7
          %v1042 = vsub.s32 %v1039, %v1041
          %v1043 = vrot.slane %v1035, %v1042
          %v1045 = vunpack.c.l.s4 1934713408
          %v1046 = vunpack.c.0.s8 %v1045
          %v1047 = vlaneseq
          %v1048 = vshrl.u32 %v1047, 7
          %v1049 = vsub.s32 %v1046, %v1048
          %v1050 = vrot.slane %v1036, %v1049
          %v1051 = vcombine.low %v1026, %v1034
          %v1052 = vcombine.high %v1026, %v1034
          %v1054 = vunpack.c.l.s4 1934713408
          %v1055 = vunpack.c.0.s8 %v1054
          %v1056 = vlaneseq
          %v1057 = vshrl.u32 %v1056, 7
          %v1058 = vsub.s32 %v1055, %v1057
          %v1059 = vrot.slane %v1051, %v1058
          %v1061 = vunpack.c.l.s4 1934713408
          %v1062 = vunpack.c.0.s8 %v1061
          %v1063 = vlaneseq
          %v1064 = vshrl.u32 %v1063, 7
          %v1065 = vsub.s32 %v1062, %v1064
          %v1066 = vrot.slane %v1052, %v1065
          %v1067 = vcombine.low %v1043, %v1059
          %v1068 = vcombine.high %v1043, %v1059
          %v1069 = vcombine.low %v1050, %v1066
          %v1070 = vcombine.high %v1050, %v1066
          %1072 = vrot.lane.b32.xlu0 %v1068, 8
          %v1073 = vpop.permute.xlu0 %1072
          %1076 = vrot.lane.b32.xlu0 %v1069, 16
          %v1077 = vpop.permute.xlu0 %1076
          %1080 = vrot.lane.b32.xlu0 %v1070, 24
          %v1081 = vpop.permute.xlu0 %1080
          %v1083 = vsel %vm389, %v1067, %v1073
          %vm1084 = vcmask 130048
          %v1085 = vsel %vm1084, %v1083, %v1077
          %vm1086 = vcmask 195584
          %v1087 = vsel %vm1086, %v1085, %v1081
          %vm1088 = vcmask 261120
          %1089 = vst.msk [vmem:[%s341] sm:$0xff] %vm1088, %v1087
        $region56: #{tpu_custom_call.1} parent=35 // pred_fallthru
          _
        %s1090 = sand.u32 %s165, 1
        %s1091 = scalar_lea.sflag [#allocation7], %s1090
        %s1092 = sand.u32 %s165, 1
        %s1093 = smul.addr %s1092, 8
        %s1094 = scalar_lea.vmem [#allocation11], %s1093
        // Predicated region
        $region57: #{tpu_custom_call.1} parent=35 // pred_check
          %p1095 = pneg %p175
        $region58: #{tpu_custom_call.1} parent=35 // pred_check_branch
          %1097 = sbr.rel (%p1095) target = $region60
        $region59: #{tpu_custom_call.1} parent=35 // pred_region
          %s1099 = ssub.s32 128, 128
          %1100 = vsyncadd %s1091, %s1099
          %s1101 = sadd.s32 %s30, %s29
          %s1102 = smul.addr %s1101, 128
          %s1103 = scalar_lea.hbm %s4, %s1102
          %s1105 = sshll.u32 %s1094, 4
          %s1106 = int_to_ptr.vmem [resolvable:$true] %s1105
          %1108 = dma.vmem_to_hbm [thread:$0]  %s1106, 128, %s1103, %s1091
        $region60: #{tpu_custom_call.1} parent=35 // pred_fallthru
          _
      $region36: #{tpu_custom_call.1} parent=5 // pred_fallthru
        _
      %p1109 = scmp.le.s32.totalorder 2, %s19
      // Predicated region
      $region61: #{tpu_custom_call.1} parent=5 // pred_check
        %p1110 = pneg %p1109
      $region62: #{tpu_custom_call.1} parent=5 // pred_check_branch
        %1112 = sbr.rel (%p1110) target = $region64
      $region63: #{tpu_custom_call.1} parent=5 // pred_region
        %s1113 = ssub.s32 %s19, 2
        // Predicated region
        $region65: #{tpu_custom_call.1} parent=63 // pred_check
          %p1114 = pneg %p181
        $region66: #{tpu_custom_call.1} parent=63 // pred_check_branch
          %1116 = sbr.rel (%p1114) target = $region68
        $region67: #{tpu_custom_call.1} parent=63 // pred_region
          %s1117 = sand.u32 %s166, 1
          %s1118 = scalar_lea.sflag [#allocation7], %s1117
          %s1119 = sand.u32 %s166, 1
          %s1120 = smul.addr %s1119, 8
          %s1121 = scalar_lea.vmem [#allocation11], %s1120
          %1122 = dma.done %s1118, 128
        $region68: #{tpu_custom_call.1} parent=63 // pred_fallthru
          _
      $region64: #{tpu_custom_call.1} parent=5 // pred_fallthru
        _
    $region6: #{tpu_custom_call.1} parent=1 // loop_footer
      %s23 = sadd.s32 1, %s19
    $region7: #{tpu_custom_call.1} parent=1 // loop_footer_branch
      %18 = sbr.rel target = $region3
    $region8: #{tpu_custom_call.1} parent=1 // loop_exit
      _
    %1123 = vsyncpa [#allocation6], 1
    %s1124 = scalar_lea.sflag [#allocation6], 1
    %1125 = vsyncpa %s1124, 1
    %1126 = vsyncpa [#allocation9], 1
    %s1127 = scalar_lea.sflag [#allocation9], 1
    %1128 = vsyncpa %s1127, 1
    %1129 = vsyncpa [#allocation7], 1
    %s1130 = scalar_lea.sflag [#allocation7], 1
    %1131 = vsyncpa %s1130, 1

</llo_original>
